<compile_context>
chip_gen: v5e
topology: v5e:2x2
jax: 0.10.0
libtpu: 0.0.40
codegen_flags: <defaults>
</compile_context>

<pallas_src>
import jax
import jax.numpy as jnp
from jax.experimental import pallas as pl
from jax.experimental.pallas import tpu as pltpu


def _round_up(a, m):
    return (a + m - 1) // m * m


def _round_down(a, m):
    return (a // m) * m


def _gate_from_stats(s, ss, inv_hw, w1t, b1t, w2, b2):
    """s, ss: (C, 1) f32 per-channel sum / sum-of-squares. Returns (C, 1) gate."""
    mean = s * inv_hw                                       # (C, 1)
    var = jnp.maximum((ss - s * mean) * inv_hw, 0.0)        # one-pass var, clamped
    y = jnp.sqrt(var) + mean                                # contrast + avg_pool, (C, 1)
    # conv1 (C -> Cr) + ReLU : reduce over sublane (channel) axis
    h = jnp.sum(w1t * y, axis=0, keepdims=True) + b1t       # (1, Cr)
    h = jnp.maximum(h, 0.0)
    # conv2 (Cr -> C) + sigmoid : reduce over lane (Cr) axis
    g = jnp.sum(w2 * h, axis=1, keepdims=True) + b2         # (C, 1)
    return jax.nn.sigmoid(g)


# ---------------------------------------------------------------------------
# Fused single-pass kernel: one image per grid step, x read once.
# ---------------------------------------------------------------------------
def _make_fused_kernel(inv_hw):
    def kernel(x_ref, w1t_ref, b1t_ref, w2_ref, b2_ref, o_ref):
        x = x_ref[0].astype(jnp.float32)                    # (C, HW)
        s = jnp.sum(x, axis=1, keepdims=True)               # (C, 1)
        ss = jnp.sum(x * x, axis=1, keepdims=True)          # (C, 1)
        g = _gate_from_stats(s, ss, inv_hw,
                             w1t_ref[...], b1t_ref[...], w2_ref[...], b2_ref[...])
        o_ref[0] = (x * g).astype(o_ref.dtype)
    return kernel


# ---------------------------------------------------------------------------
# Two-pass path for large images.
# Pass 1: per-channel sum / sumsq accumulated in VMEM scratch across HW tiles,
#         gate computed in the epilogue of the last tile (no stats HBM round-trip).
# ---------------------------------------------------------------------------
def _make_stats_gate_kernel(C, T, HW, num_t, inv_hw, needs_mask):
    def kernel(x_ref, w1t_ref, b1t_ref, w2_ref, b2_ref, gate_ref, sum_sc, sumsq_sc):
        t = pl.program_id(1)
        x = x_ref[0].astype(jnp.float32)                    # (C, T)
        if needs_mask:
            # Pallas boundary-block reads are not guaranteed zero: mask the tail.
            lane = jax.lax.broadcasted_iota(jnp.int32, (C, T), 1)
            x = jnp.where(lane < (HW - t * T), x, 0.0)
        ps = jnp.sum(x, axis=1, keepdims=True)               # (C, 1)
        pss = jnp.sum(x * x, axis=1, keepdims=True)          # (C, 1)

        @pl.when(t == 0)
        def _init():
            sum_sc[...] = ps
            sumsq_sc[...] = pss

        @pl.when(t != 0)
        def _acc():
            sum_sc[...] += ps
            sumsq_sc[...] += pss

        @pl.when(t == num_t - 1)
        def _finalize():
            gate_ref[0] = _gate_from_stats(
                sum_sc[...], sumsq_sc[...], inv_hw,
                w1t_ref[...], b1t_ref[...], w2_ref[...], b2_ref[...])
    return kernel


# Pass 2: lane-dense rescale; last (partial) tile relies on clipped boundary stores.
def cca_scale_kernel(x_ref, gate_ref, o_ref):
    o_ref[0] = (x_ref[0] * gate_ref[0]).astype(o_ref.dtype)


# ---------------------------------------------------------------------------
# Wrapper
# ---------------------------------------------------------------------------
def cca_layer(x, w1, b1, w2, b2, *, block_bytes=4 << 20, force_two_pass=False):
    """x: (N, C, H, W); w1: (Cr, C), b1: (Cr, 1), w2: (C, Cr), b2: (C, 1).

    Matches CCALayer.forward: x * sigmoid(conv2(relu(conv1(std(x) + mean(x)))))."""
    N, C, H, W = x.shape
    HW = H * W
    Cr = w1.shape[0]
    itemsize = jnp.dtype(x.dtype).itemsize
    inv_hw = 1.0 / float(HW)

    x2 = x.reshape(N, C, HW)            # free reshape (contiguous)
    w1t = jnp.transpose(w1)             # (C, Cr): channels on sublanes in-kernel
    b1t = jnp.reshape(b1, (1, Cr))
    # w2: (C, Cr), b2: (C, 1) already in the layout the kernel wants.

    img_bytes = C * HW * itemsize

    # ---- fused single-pass variant: x read from HBM exactly once ----
    if (not force_two_pass) and img_bytes <= (6 << 20):
        vmem = int(min(max(4 * img_bytes + (4 << 20), 8 << 20), 48 << 20))
        out2 = pl.pallas_call(
            _make_fused_kernel(inv_hw),
            out_shape=jax.ShapeDtypeStruct((N, C, HW), x.dtype),
            grid_spec=pltpu.PrefetchScalarGridSpec(
                num_scalar_prefetch=0,
                grid=(N,),
                in_specs=[
                    pl.BlockSpec((1, C, HW), lambda b: (b, 0, 0)),
                    pl.BlockSpec((C, Cr), lambda b: (0, 0)),
                    pl.BlockSpec((1, Cr), lambda b: (0, 0)),
                    pl.BlockSpec((C, Cr), lambda b: (0, 0)),
                    pl.BlockSpec((C, 1), lambda b: (0, 0)),
                ],
                out_specs=pl.BlockSpec((1, C, HW), lambda b: (b, 0, 0)),
            ),
            compiler_params=pltpu.CompilerParams(
                dimension_semantics=("parallel",),
                vmem_limit_bytes=vmem),
        )(x2, w1t, b1t, w2, b2)
        return out2.reshape(N, C, H, W)

    # ---- two-pass path: lane-dense HW tiles sized by a byte budget ----
    T = max(128, _round_down(block_bytes // (itemsize * C), 128))
    T = min(T, _round_up(HW, 128))
    num_t = pl.cdiv(HW, T)
    needs_mask = (HW % T) != 0
    blk_bytes = C * T * itemsize
    vmem1 = int(min(max(3 * blk_bytes + (4 << 20), 8 << 20), 48 << 20))
    vmem2 = int(min(max(5 * blk_bytes + (4 << 20), 8 << 20), 48 << 20))

    gate = pl.pallas_call(
        _make_stats_gate_kernel(C, T, HW, num_t, inv_hw, needs_mask),
        out_shape=jax.ShapeDtypeStruct((N, C, 1), jnp.float32),
        grid_spec=pltpu.PrefetchScalarGridSpec(
            num_scalar_prefetch=0,
            grid=(N, num_t),
            in_specs=[
                pl.BlockSpec((1, C, T), lambda b, t: (b, 0, t)),
                pl.BlockSpec((C, Cr), lambda b, t: (0, 0)),
                pl.BlockSpec((1, Cr), lambda b, t: (0, 0)),
                pl.BlockSpec((C, Cr), lambda b, t: (0, 0)),
                pl.BlockSpec((C, 1), lambda b, t: (0, 0)),
            ],
            out_specs=pl.BlockSpec((1, C, 1), lambda b, t: (b, 0, 0)),
            scratch_shapes=[pltpu.VMEM((C, 1), jnp.float32),
                            pltpu.VMEM((C, 1), jnp.float32)],
        ),
        compiler_params=pltpu.CompilerParams(
            dimension_semantics=("parallel", "arbitrary"),
            vmem_limit_bytes=vmem1),
    )(x2, w1t, b1t, w2, b2)

    out2 = pl.pallas_call(
        cca_scale_kernel,
        out_shape=jax.ShapeDtypeStruct((N, C, HW), x.dtype),
        grid_spec=pltpu.PrefetchScalarGridSpec(
            num_scalar_prefetch=0,
            grid=(N, num_t),
            in_specs=[
                pl.BlockSpec((1, C, T), lambda b, t: (b, 0, t)),
                pl.BlockSpec((1, C, 1), lambda b, t: (b, 0, 0)),
            ],
            out_specs=pl.BlockSpec((1, C, T), lambda b, t: (b, 0, t)),
        ),
        compiler_params=pltpu.CompilerParams(
            dimension_semantics=("parallel", "parallel"),
            vmem_limit_bytes=vmem2),
    )(x2, gate)
    return out2.reshape(N, C, H, W)


# ---------------------------------------------------------------------------
# Pure-JAX reference mirroring the PyTorch module (population std, two-pass).
# ---------------------------------------------------------------------------
def reference(x, w1, b1, w2, b2):
    mean = jnp.mean(x, axis=(2, 3), keepdims=True)
    var = jnp.mean((x - mean) ** 2, axis=(2, 3), keepdims=True)
    y = jnp.sqrt(var) + mean                                  # (N, C, 1, 1)
    yv = y[:, :, 0, 0]                                        # (N, C)
    h = jnp.maximum(yv @ w1.T + b1[:, 0], 0.0)                # (N, Cr)
    z = jax.nn.sigmoid(h @ w2.T + b2[:, 0])                   # (N, C)
    return x * z[:, :, None, None]


if __name__ == "__main__":
    # --- test 1: fused single-pass path (shapes per CCALayer defaults) ---
    N, C, H, W = 2, 32, 16, 16
    reduction = 16
    Cr = C // reduction  # 2

    key = jax.random.PRNGKey(0)
    kx, k1, k2, k3, k4 = jax.random.split(key, 5)
    x = jax.random.normal(kx, (N, C, H, W), dtype=jnp.float32)
    w1 = jax.random.normal(k1, (Cr, C), dtype=jnp.float32) * 0.1   # Conv2d(C, C//r, 1)
    b1 = jax.random.normal(k2, (Cr, 1), dtype=jnp.float32) * 0.1
    w2 = jax.random.normal(k3, (C, Cr), dtype=jnp.float32) * 0.1   # Conv2d(C//r, C, 1)
    b2 = jax.random.normal(k4, (C, 1), dtype=jnp.float32) * 0.1

    ref = reference(x, w1, b1, w2, b2)
    out = jax.block_until_ready(cca_layer(x, w1, b1, w2, b2))
    assert out.shape == x.shape
    assert jnp.allclose(out, ref, atol=1e-5, rtol=1e-5), "fused path mismatch"

    # --- test 2: same inputs through the tiled two-pass path ---
    out2 = jax.block_until_ready(cca_layer(x, w1, b1, w2, b2, force_two_pass=True))
    assert jnp.allclose(out2, ref, atol=1e-5, rtol=1e-5), "two-pass path mismatch"

    # --- test 3: two-pass path with a ragged HW tail (mask + clipped stores) ---
    N3, C3, H3, W3 = 1, 8, 15, 13          # HW = 195, not a multiple of 128
    Cr3 = 2
    kx3, k13, k23, k33, k43 = jax.random.split(jax.random.PRNGKey(0), 5)
    x3 = jax.random.normal(kx3, (N3, C3, H3, W3), dtype=jnp.float32)
    w13 = jax.random.normal(k13, (Cr3, C3), dtype=jnp.float32) * 0.1
    b13 = jax.random.normal(k23, (Cr3, 1), dtype=jnp.float32) * 0.1
    w23 = jax.random.normal(k33, (C3, Cr3), dtype=jnp.float32) * 0.1
    b23 = jax.random.normal(k43, (C3, 1), dtype=jnp.float32) * 0.1
    ref3 = reference(x3, w13, b13, w23, b23)
    out3 = jax.block_until_ready(
        cca_layer(x3, w13, b13, w23, b23, block_bytes=4096, force_two_pass=True))
    assert jnp.allclose(out3, ref3, atol=1e-5, rtol=1e-5), "ragged-tail path mismatch"

    print("KERNEL_OK")
</pallas_src>

<mosaic_0001>
module attributes {stable_mosaic.version = 11 : i64} {
  func.func @kernel(%arg0: i32, %arg1: memref<1x32x256xf32, #tpu.memory_space<vmem>>, %arg2: memref<32x2xf32, #tpu.memory_space<vmem>>, %arg3: memref<1x2xf32, #tpu.memory_space<vmem>>, %arg4: memref<32x2xf32, #tpu.memory_space<vmem>>, %arg5: memref<32x1xf32, #tpu.memory_space<vmem>>, %arg6: memref<1x32x256xf32, #tpu.memory_space<vmem>>) attributes {dimension_semantics = [#tpu.dimension_semantics<parallel>], iteration_bounds = array<i64: 2>, scalar_prefetch = 0 : i64, scratch_operands = 0 : i64, tpu.core_type = #tpu.core_type<tc>, window_params = [{transform_indices = @transform_0, window_bounds = array<i64: 1, 32, 256>}, {pipeline_mode = #tpu.pipeline_mode<synchronous>, transform_indices = @transform_1, window_bounds = array<i64: 32, 2>}, {pipeline_mode = #tpu.pipeline_mode<synchronous>, transform_indices = @transform_2, window_bounds = array<i64: 1, 2>}, {pipeline_mode = #tpu.pipeline_mode<synchronous>, transform_indices = @transform_3, window_bounds = array<i64: 32, 2>}, {pipeline_mode = #tpu.pipeline_mode<synchronous>, transform_indices = @transform_4, window_bounds = array<i64: 32, 1>}, {transform_indices = @transform_5, window_bounds = array<i64: 1, 32, 256>}]} {
    %c0 = arith.constant 0 : index
    %c0_0 = arith.constant 0 : index
    %c0_1 = arith.constant 0 : index
    %0 = vector.load %arg1[%c0, %c0_0, %c0_1] : memref<1x32x256xf32, #tpu.memory_space<vmem>>, vector<1x32x256xf32>
    %1 = vector.shape_cast %0 : vector<1x32x256xf32> to vector<32x256xf32>
    %cst = arith.constant dense<0.000000e+00> : vector<32xf32>
    %2 = vector.multi_reduction <add>, %1, %cst [1] : vector<32x256xf32> to vector<32xf32>
    %3 = vector.shape_cast %2 : vector<32xf32> to vector<32x1xf32>
    %4 = arith.mulf %1, %1 : vector<32x256xf32>
    %cst_2 = arith.constant dense<0.000000e+00> : vector<32xf32>
    %5 = vector.multi_reduction <add>, %4, %cst_2 [1] : vector<32x256xf32> to vector<32xf32>
    %6 = vector.shape_cast %5 : vector<32xf32> to vector<32x1xf32>
    %c0_3 = arith.constant 0 : index
    %c0_4 = arith.constant 0 : index
    %7 = vector.load %arg2[%c0_3, %c0_4] : memref<32x2xf32, #tpu.memory_space<vmem>>, vector<32x2xf32>
    %c0_5 = arith.constant 0 : index
    %c0_6 = arith.constant 0 : index
    %8 = vector.load %arg3[%c0_5, %c0_6] : memref<1x2xf32, #tpu.memory_space<vmem>>, vector<1x2xf32>
    %c0_7 = arith.constant 0 : index
    %c0_8 = arith.constant 0 : index
    %9 = vector.load %arg4[%c0_7, %c0_8] : memref<32x2xf32, #tpu.memory_space<vmem>>, vector<32x2xf32>
    %c0_9 = arith.constant 0 : index
    %c0_10 = arith.constant 0 : index
    %10 = vector.load %arg5[%c0_9, %c0_10] : memref<32x1xf32, #tpu.memory_space<vmem>>, vector<32x1xf32>
    %cst_11 = arith.constant 3.906250e-03 : f32
    %11 = vector.broadcast %cst_11 : f32 to vector<32x1xf32>
    %12 = arith.mulf %3, %11 : vector<32x1xf32>
    %13 = arith.mulf %3, %12 : vector<32x1xf32>
    %14 = arith.subf %6, %13 : vector<32x1xf32>
    %cst_12 = arith.constant 3.906250e-03 : f32
    %15 = vector.broadcast %cst_12 : f32 to vector<32x1xf32>
    %16 = arith.mulf %14, %15 : vector<32x1xf32>
    %cst_13 = arith.constant 0.000000e+00 : f32
    %17 = vector.broadcast %cst_13 : f32 to vector<32x1xf32>
    %18 = arith.maximumf %16, %17 : vector<32x1xf32>
    %19 = math.sqrt %18 : vector<32x1xf32>
    %20 = arith.addf %19, %12 : vector<32x1xf32>
    %21 = vector.broadcast %20 : vector<32x1xf32> to vector<32x2xf32>
    %22 = arith.mulf %7, %21 : vector<32x2xf32>
    %cst_14 = arith.constant dense<0.000000e+00> : vector<2xf32>
    %23 = vector.multi_reduction <add>, %22, %cst_14 [0] : vector<32x2xf32> to vector<2xf32>
    %24 = vector.shape_cast %23 : vector<2xf32> to vector<1x2xf32>
    %25 = arith.addf %24, %8 : vector<1x2xf32>
    %cst_15 = arith.constant 0.000000e+00 : f32
    %26 = vector.broadcast %cst_15 : f32 to vector<1x2xf32>
    %27 = arith.maximumf %25, %26 : vector<1x2xf32>
    %28 = vector.broadcast %27 : vector<1x2xf32> to vector<32x2xf32>
    %29 = arith.mulf %9, %28 : vector<32x2xf32>
    %cst_16 = arith.constant dense<0.000000e+00> : vector<32xf32>
    %30 = vector.multi_reduction <add>, %29, %cst_16 [1] : vector<32x2xf32> to vector<32xf32>
    %31 = vector.shape_cast %30 : vector<32xf32> to vector<32x1xf32>
    %32 = arith.addf %31, %10 : vector<32x1xf32>
    %33 = arith.negf %32 : vector<32x1xf32>
    %34 = math.exp %33 : vector<32x1xf32>
    %cst_17 = arith.constant 1.000000e+00 : f32
    %35 = vector.broadcast %cst_17 : f32 to vector<32x1xf32>
    %36 = arith.addf %35, %34 : vector<32x1xf32>
    %37 = arith.divf %35, %36 : vector<32x1xf32>
    %38 = vector.broadcast %37 : vector<32x1xf32> to vector<32x256xf32>
    %39 = arith.mulf %1, %38 : vector<32x256xf32>
    %c0_18 = arith.constant 0 : index
    %c0_19 = arith.constant 0 : index
    %c0_20 = arith.constant 0 : index
    %40 = vector.load %arg6[%c0_18, %c0_19, %c0_20] : memref<1x32x256xf32, #tpu.memory_space<vmem>>, vector<1x32x256xf32>
    %41 = vector.shape_cast %40 : vector<1x32x256xf32> to vector<32x256xf32>
    %42 = vector.shape_cast %39 : vector<32x256xf32> to vector<1x32x256xf32>
    tpu.vector_store %arg6[%c0_18, %c0_19, %c0_20], %42 {strides = array<i32>} : memref<1x32x256xf32, #tpu.memory_space<vmem>>, vector<1x32x256xf32>,
    return
  }
  func.func @transform_0(%arg0: i32) -> (i32, i32, i32) {
    %c0_i32 = arith.constant 0 : i32
    %c0_i32_0 = arith.constant 0 : i32
    %c0_i32_1 = arith.constant 0 : i32
    return %arg0, %c0_i32, %c0_i32_0 : i32, i32, i32
  }
  func.func @transform_1(%arg0: i32) -> (i32, i32) {
    %c0_i32 = arith.constant 0 : i32
    %c0_i32_0 = arith.constant 0 : i32
    %c0_i32_1 = arith.constant 0 : i32
    return %c0_i32, %c0_i32_0 : i32, i32
  }
  func.func @transform_2(%arg0: i32) -> (i32, i32) {
    %c0_i32 = arith.constant 0 : i32
    %c0_i32_0 = arith.constant 0 : i32
    %c0_i32_1 = arith.constant 0 : i32
    return %c0_i32, %c0_i32_0 : i32, i32
  }
  func.func @transform_3(%arg0: i32) -> (i32, i32) {
    %c0_i32 = arith.constant 0 : i32
    %c0_i32_0 = arith.constant 0 : i32
    %c0_i32_1 = arith.constant 0 : i32
    return %c0_i32, %c0_i32_0 : i32, i32
  }
  func.func @transform_4(%arg0: i32) -> (i32, i32) {
    %c0_i32 = arith.constant 0 : i32
    %c0_i32_0 = arith.constant 0 : i32
    %c0_i32_1 = arith.constant 0 : i32
    return %c0_i32, %c0_i32_0 : i32, i32
  }
  func.func @transform_5(%arg0: i32) -> (i32, i32, i32) {
    %c0_i32 = arith.constant 0 : i32
    %c0_i32_0 = arith.constant 0 : i32
    %c0_i32_1 = arith.constant 0 : i32
    return %arg0, %c0_i32, %c0_i32_0 : i32, i32, i32
  }
}

</mosaic_0001>

<llo_original>
// kernel: tpu_custom_call.1
$region0: #{tpu_custom_call.1}
  #allocation0 [shape = 'u32[]', space=smem, size = 0x4, offset = 0x4, fixed_abs, tag = 'smem constant byte address 0x4 - core index']
  #allocation1 [shape = 'u32[72,128]{1,0:T(1,128)}', space=vmem, size = 0x9000, scoped, tag = 'internal scratch']
  %s0 = inlined_call_operand.hbm [shape: f32[2,32,256], index: 0, kind: input, shape index: {}]
  %s1 = inlined_call_operand.vmem [shape: f32[32,2], index: 1, kind: input, shape index: {}]
  %s2 = inlined_call_operand.vmem [shape: f32[1,2], index: 2, kind: input, shape index: {}]
  %s3 = inlined_call_operand.vmem [shape: f32[32,2], index: 3, kind: input, shape index: {}]
  %s4 = inlined_call_operand.vmem [shape: f32[32,1], index: 4, kind: input, shape index: {}]
  %s5 = inlined_call_operand.hbm [shape: f32[2,32,256], index: 5, kind: output, shape index: {}]
  %s6 = sld [smem:[#allocation0]]
  $region57: #{tpu_custom_call.1} parent=0
    _
  %s8 = ssub.s32 1, %s6
  %s9 = scalar_select 0, %s8, %s6
  $region1: #{tpu_custom_call.1} parent=0
    #allocation2 [shape = 'u8[65536]{0}', space=vmem, size = 0x10000, scoped, tag = 'input window, operand 0']
    #allocation3 [shape = 's32[2]{0}', space=sflag, size = 0x8, scoped, tag = 'scoped memory for tpu_custom_call.1']
    #allocation4 [shape = 's32[2]{0}', space=sflag, size = 0x8, scoped, tag = 'scoped memory for tpu_custom_call.1']
    #allocation5 [shape = 'u8[65536]{0}', space=vmem, size = 0x10000, scoped, tag = 'output window, operand 0']
    %10 = vsyncpa [#allocation3], 0
    %s11 = scalar_lea.sflag [#allocation3], 1
    %12 = vsyncpa %s11, 0
    %13 = vsyncpa [#allocation4], 0
    %s14 = scalar_lea.sflag [#allocation4], 1
    %15 = vsyncpa %s14, 0
    loop: start=0, step=1, limit=4
    $region2: #{tpu_custom_call.1} parent=1 // loop_pre_header
      _
    $region3: #{tpu_custom_call.1} parent=1 // loop_header
      %s17 = sphi 0, %s21
      %p18 = scmp.ge.s32.totalorder %s17, 4
      %s27 = sphi 0, %s29
      %s30 = sphi 0, %s27
      %s31 = sphi 0, %s30
      %s47 = sphi 0, %s31
      %s51 = sphi 0, %s51
      %s53 = sphi 0, %s51
      %s54 = sphi 0, %s53
      %s68 = sphi 0, %s54
      %s72 = sphi 0, %s72
      %s74 = sphi 0, %s72
      %s75 = sphi 0, %s74
      %s89 = sphi 0, %s75
      %s93 = sphi 0, %s93
      %s95 = sphi 0, %s93
      %s96 = sphi 0, %s95
      %s110 = sphi 0, %s96
      %s114 = sphi 0, %s114
      %s116 = sphi 0, %s114
      %s117 = sphi 0, %s116
      %s131 = sphi 0, %s117
      %s137 = sphi 0, %s139
      %s140 = sphi 0, %s137
      %s141 = sphi 0, %s140
      %s157 = sphi 0, %s141
    $region4: #{tpu_custom_call.1} parent=1 // loop_header_branch
      %20 = sbr.rel (%p18) target = $region8
    $region5: #{tpu_custom_call.1} parent=1 // loop_body
      %s22 = ssub.s32 %s17, 1
      %s23 = ssub.s32 %s17, 2
      %s24 = sadd.s32 %s17, 1
      %s25 = ssub.s32 %s17, %s24
      %p26 = scmp.eq.s32.totalorder %s25, 0
      %s28 = sadd.s32 %s27, 1
      %s29 = scalar_select %p26, %s27, %s28
      %p32 = pneg %p26
      %p33 = scmp.eq.s32.totalorder %s17, 1
      %p34 = por %p32, %p33
      %p35 = scmp.ne.s32.totalorder %s27, %s30
      %p36 = scmp.eq.s32.totalorder %s17, 0
      %p37 = por %p35, %p36
      %p38 = scmp.ne.s32.totalorder %s27, %s30
      %p39 = scmp.eq.s32.totalorder %s22, 1
      %p40 = por %p38, %p39
      %p41 = scmp.ne.s32.totalorder %s30, %s31
      %p42 = scmp.eq.s32.totalorder %s22, 0
      %p43 = por %p41, %p42
      %p44 = scmp.ne.s32.totalorder %s30, %s31
      %p45 = scmp.eq.s32.totalorder %s23, 1
      %p46 = por %p44, %p45
      %p48 = scmp.ne.s32.totalorder %s31, %s47
      %p49 = scmp.eq.s32.totalorder %s23, 0
      %p50 = por %p48, %p49
      %s52 = sadd.s32 %s51, 1
      %p55 = scmp.eq.s32.totalorder %s17, 1
      %p56 = scmp.ne.s32.totalorder %s51, %s53
      %p57 = scmp.eq.s32.totalorder %s17, 0
      %p58 = por %p56, %p57
      %p59 = scmp.ne.s32.totalorder %s51, %s53
      %p60 = scmp.eq.s32.totalorder %s22, 1
      %p61 = por %p59, %p60
      %p62 = scmp.ne.s32.totalorder %s53, %s54
      %p63 = scmp.eq.s32.totalorder %s22, 0
      %p64 = por %p62, %p63
      %p65 = scmp.ne.s32.totalorder %s53, %s54
      %p66 = scmp.eq.s32.totalorder %s23, 1
      %p67 = por %p65, %p66
      %p69 = scmp.ne.s32.totalorder %s54, %s68
      %p70 = scmp.eq.s32.totalorder %s23, 0
      %p71 = por %p69, %p70
      %s73 = sadd.s32 %s72, 1
      %p76 = scmp.eq.s32.totalorder %s17, 1
      %p77 = scmp.ne.s32.totalorder %s72, %s74
      %p78 = scmp.eq.s32.totalorder %s17, 0
      %p79 = por %p77, %p78
      %p80 = scmp.ne.s32.totalorder %s72, %s74
      %p81 = scmp.eq.s32.totalorder %s22, 1
      %p82 = por %p80, %p81
      %p83 = scmp.ne.s32.totalorder %s74, %s75
      %p84 = scmp.eq.s32.totalorder %s22, 0
      %p85 = por %p83, %p84
      %p86 = scmp.ne.s32.totalorder %s74, %s75
      %p87 = scmp.eq.s32.totalorder %s23, 1
      %p88 = por %p86, %p87
      %p90 = scmp.ne.s32.totalorder %s75, %s89
      %p91 = scmp.eq.s32.totalorder %s23, 0
      %p92 = por %p90, %p91
      %s94 = sadd.s32 %s93, 1
      %p97 = scmp.eq.s32.totalorder %s17, 1
      %p98 = scmp.ne.s32.totalorder %s93, %s95
      %p99 = scmp.eq.s32.totalorder %s17, 0
      %p100 = por %p98, %p99
      %p101 = scmp.ne.s32.totalorder %s93, %s95
      %p102 = scmp.eq.s32.totalorder %s22, 1
      %p103 = por %p101, %p102
      %p104 = scmp.ne.s32.totalorder %s95, %s96
      %p105 = scmp.eq.s32.totalorder %s22, 0
      %p106 = por %p104, %p105
      %p107 = scmp.ne.s32.totalorder %s95, %s96
      %p108 = scmp.eq.s32.totalorder %s23, 1
      %p109 = por %p107, %p108
      %p111 = scmp.ne.s32.totalorder %s96, %s110
      %p112 = scmp.eq.s32.totalorder %s23, 0
      %p113 = por %p111, %p112
      %s115 = sadd.s32 %s114, 1
      %p118 = scmp.eq.s32.totalorder %s17, 1
      %p119 = scmp.ne.s32.totalorder %s114, %s116
      %p120 = scmp.eq.s32.totalorder %s17, 0
      %p121 = por %p119, %p120
      %p122 = scmp.ne.s32.totalorder %s114, %s116
      %p123 = scmp.eq.s32.totalorder %s22, 1
      %p124 = por %p122, %p123
      %p125 = scmp.ne.s32.totalorder %s116, %s117
      %p126 = scmp.eq.s32.totalorder %s22, 0
      %p127 = por %p125, %p126
      %p128 = scmp.ne.s32.totalorder %s116, %s117
      %p129 = scmp.eq.s32.totalorder %s23, 1
      %p130 = por %p128, %p129
      %p132 = scmp.ne.s32.totalorder %s117, %s131
      %p133 = scmp.eq.s32.totalorder %s23, 0
      %p134 = por %p132, %p133
      %s135 = ssub.s32 %s17, %s24
      %p136 = scmp.eq.s32.totalorder %s135, 0
      %s138 = sadd.s32 %s137, 1
      %s139 = scalar_select %p136, %s137, %s138
      %p142 = pneg %p136
      %p143 = scmp.eq.s32.totalorder %s17, 1
      %p144 = por %p142, %p143
      %p145 = scmp.ne.s32.totalorder %s137, %s140
      %p146 = scmp.eq.s32.totalorder %s17, 0
      %p147 = por %p145, %p146
      %p148 = scmp.ne.s32.totalorder %s137, %s140
      %p149 = scmp.eq.s32.totalorder %s22, 1
      %p150 = por %p148, %p149
      %p151 = scmp.ne.s32.totalorder %s140, %s141
      %p152 = scmp.eq.s32.totalorder %s22, 0
      %p153 = por %p151, %p152
      %p154 = scmp.ne.s32.totalorder %s140, %s141
      %p155 = scmp.eq.s32.totalorder %s23, 1
      %p156 = por %p154, %p155
      %p158 = scmp.ne.s32.totalorder %s141, %s157
      %p159 = scmp.eq.s32.totalorder %s23, 0
      %p160 = por %p158, %p159
      %p161 = scmp.le.s32.totalorder 1, %s17
      %p162 = scmp.lt.s32.totalorder %s17, 3
      %p163 = pnand %p161, %p162
      %p164 = pneg %p163
      // Predicated region
      $region9: #{tpu_custom_call.1} parent=5 // pred_check
        _
      $region10: #{tpu_custom_call.1} parent=5 // pred_check_branch
        %166 = sbr.rel (%p163) target = $region12
      $region11: #{tpu_custom_call.1} parent=5 // pred_region
        %s167 = ssub.s32 %s17, 1
        // Predicated region
        $region13: #{tpu_custom_call.1} parent=11 // pred_check
          %p168 = pneg %p64
        $region14: #{tpu_custom_call.1} parent=11 // pred_check_branch
          %170 = sbr.rel (%p168) target = $region16
        $region15: #{tpu_custom_call.1} parent=11 // pred_region
          _
        $region16: #{tpu_custom_call.1} parent=11 // pred_fallthru
          _
        // Predicated region
        $region17: #{tpu_custom_call.1} parent=11 // pred_check
          %p171 = pneg %p85
        $region18: #{tpu_custom_call.1} parent=11 // pred_check_branch
          %173 = sbr.rel (%p171) target = $region20
        $region19: #{tpu_custom_call.1} parent=11 // pred_region
          _
        $region20: #{tpu_custom_call.1} parent=11 // pred_fallthru
          _
        // Predicated region
        $region21: #{tpu_custom_call.1} parent=11 // pred_check
          %p174 = pneg %p106
        $region22: #{tpu_custom_call.1} parent=11 // pred_check_branch
          %176 = sbr.rel (%p174) target = $region24
        $region23: #{tpu_custom_call.1} parent=11 // pred_region
          _
        $region24: #{tpu_custom_call.1} parent=11 // pred_fallthru
          _
        // Predicated region
        $region25: #{tpu_custom_call.1} parent=11 // pred_check
          %p177 = pneg %p127
        $region26: #{tpu_custom_call.1} parent=11 // pred_check_branch
          %179 = sbr.rel (%p177) target = $region28
        $region27: #{tpu_custom_call.1} parent=11 // pred_region
          _
        $region28: #{tpu_custom_call.1} parent=11 // pred_fallthru
          _
      $region12: #{tpu_custom_call.1} parent=5 // pred_fallthru
        _
      %p180 = scmp.lt.s32.totalorder %s17, 2
      // Predicated region
      $region29: #{tpu_custom_call.1} parent=5 // pred_check
        %p181 = pneg %p180
      $region30: #{tpu_custom_call.1} parent=5 // pred_check_branch
        %183 = sbr.rel (%p181) target = $region32
      $region31: #{tpu_custom_call.1} parent=5 // pred_region
        // Predicated region
        $region33: #{tpu_custom_call.1} parent=31 // pred_check
          %p184 = pneg %p37
        $region34: #{tpu_custom_call.1} parent=31 // pred_check_branch
          %186 = sbr.rel (%p184) target = $region36
        $region35: #{tpu_custom_call.1} parent=31 // pred_region
          %s187 = sand.u32 %s27, 1
          %s188 = scalar_lea.sflag [#allocation3], %s187
          %s189 = sand.u32 %s27, 1
          %s190 = smul.addr %s189, 64
          %s191 = scalar_lea.vmem [#allocation2], %s190
          %193 = vsyncadd %s188, 0
          %s194 = smul.addr %s17, 8
          %s195 = smul.addr %s194, 8
          %s196 = scalar_lea.hbm %s0, %s195
          %s197 = sshll.u32 %s196, 4
          %s198 = int_to_ptr.hbm [resolvable:$true] %s197
          %s199 = sshll.u32 %s191, 4
          %s200 = int_to_ptr.vmem [resolvable:$true] %s199
          %205 = dma.hbm_to_vmem [thread:$0]  %s198, 1024, %s200, %s188, 256, 256, 16
        $region36: #{tpu_custom_call.1} parent=31 // pred_fallthru
          _
      $region32: #{tpu_custom_call.1} parent=5 // pred_fallthru
        _
      %p206 = scmp.le.s32.totalorder 1, %s17
      %p207 = scmp.lt.s32.totalorder %s17, 3
      %p208 = pnand %p206, %p207
      %p209 = pneg %p208
      // Predicated region
      $region37: #{tpu_custom_call.1} parent=5 // pred_check
        _
      $region38: #{tpu_custom_call.1} parent=5 // pred_check_branch
        %211 = sbr.rel (%p208) target = $region40
      $region39: #{tpu_custom_call.1} parent=5 // pred_region
        %s212 = ssub.s32 %s17, 1
        %s213 = sand.u32 %s30, 1
        %s214 = scalar_lea.sflag [#allocation3], %s213
        %s215 = sand.u32 %s30, 1
        %s216 = smul.addr %s215, 64
        %s217 = scalar_lea.vmem [#allocation2], %s216
        // Predicated region
        $region41: #{tpu_custom_call.1} parent=39 // pred_check
          %p218 = pneg %p43
        $region42: #{tpu_custom_call.1} parent=39 // pred_check_branch
          %220 = sbr.rel (%p218) target = $region44
        $region43: #{tpu_custom_call.1} parent=39 // pred_region
          %222 = dma.done %s214, 1024
        $region44: #{tpu_custom_call.1} parent=39 // pred_fallthru
          _
        %s223 = sand.u32 %s30, 1
        %s224 = scalar_lea.sflag [#allocation3], %s223
        %s225 = sand.u32 %s30, 1
        %s226 = smul.addr %s225, 64
        %s227 = scalar_lea.vmem [#allocation2], %s226
        %p228 = pneg %p43
        %p229 = pneg %p40
        %p230 = pneg %p64
        %p231 = pneg %p61
        %p232 = pneg %p85
        %p233 = pneg %p82
        %p234 = pneg %p106
        %p235 = pneg %p103
        %p236 = pneg %p127
        %p237 = pneg %p124
        %p238 = pneg %p153
        %p239 = pneg %p150
        %s240 = sand.u32 %s140, 1
        %s241 = scalar_lea.sflag [#allocation4], %s240
        %s242 = sand.u32 %s140, 1
        %s243 = smul.addr %s242, 64
        %s244 = scalar_lea.vmem [#allocation5], %s243
        %v245 = vld [vmem:[%s217] sm:$0xff]
        %v246 = vld [vmem:[%s217 + $0x8] sm:$0xff]
        %v247 = vld [vmem:[%s217 + $0x10] sm:$0xff]
        %v248 = vld [vmem:[%s217 + $0x18] sm:$0xff]
        %v249 = vld [vmem:[%s217 + $0x20] sm:$0xff]
        %v250 = vld [vmem:[%s217 + $0x28] sm:$0xff]
        %v251 = vld [vmem:[%s217 + $0x30] sm:$0xff]
        %v252 = vld [vmem:[%s217 + $0x38] sm:$0xff]
        %v253 = vadd.f32 %v245, %v246
        %254 = vadd.xlane.f32.xlu0 %v253
        %v255 = vpop.xlane.xlu0 %254
        %v256 = vadd.f32 %v247, %v248
        %257 = vadd.xlane.f32.xlu0 %v256
        %v258 = vpop.xlane.xlu0 %257
        %v259 = vadd.f32 %v249, %v250
        %260 = vadd.xlane.f32.xlu0 %v259
        %v261 = vpop.xlane.xlu0 %260
        %v262 = vadd.f32 %v251, %v252
        %263 = vadd.xlane.f32.xlu0 %v262
        %v264 = vpop.xlane.xlu0 %263
        %v265 = vmul.f32 %v245, %v245
        %v266 = vmul.f32 %v246, %v246
        %v267 = vmul.f32 %v247, %v247
        %v268 = vmul.f32 %v248, %v248
        %v269 = vmul.f32 %v249, %v249
        %v270 = vmul.f32 %v250, %v250
        %v271 = vmul.f32 %v251, %v251
        %v272 = vmul.f32 %v252, %v252
        %v273 = vadd.f32 %v265, %v266
        %274 = vadd.xlane.f32.xlu0 %v273
        %v275 = vpop.xlane.xlu0 %274
        %v276 = vadd.f32 %v267, %v268
        %277 = vadd.xlane.f32.xlu0 %v276
        %v278 = vpop.xlane.xlu0 %277
        %v279 = vadd.f32 %v269, %v270
        %280 = vadd.xlane.f32.xlu0 %v279
        %v281 = vpop.xlane.xlu0 %280
        %v282 = vadd.f32 %v271, %v272
        %283 = vadd.xlane.f32.xlu0 %v282
        %v284 = vpop.xlane.xlu0 %283
        %v285 = vld [vmem:[%s1] sm:$0xff]
        %v286 = vld [vmem:[%s1 + $0x8] sm:$0xff]
        %v287 = vld [vmem:[%s1 + $0x10] sm:$0xff]
        %v288 = vld [vmem:[%s1 + $0x18] sm:$0xff]
        %v289 = vld [vmem:[%s2] sm:$0x1]
        %v290 = vld [vmem:[%s3] sm:$0xff]
        %v291 = vld [vmem:[%s3 + $0x8] sm:$0xff]
        %v292 = vld [vmem:[%s3 + $0x10] sm:$0xff]
        %v293 = vld [vmem:[%s3 + $0x18] sm:$0xff]
        %v294 = vld [vmem:[%s4] sm:$0xff]
        %v295 = vld [vmem:[%s4 + $0x8] sm:$0xff]
        %v296 = vld [vmem:[%s4 + $0x10] sm:$0xff]
        %v297 = vld [vmem:[%s4 + $0x18] sm:$0xff]
        %v298 = vmul.f32 %v255, 0.00390625
        %v299 = vmul.f32 %v258, 0.00390625
        %v300 = vmul.f32 %v261, 0.00390625
        %v301 = vmul.f32 %v264, 0.00390625
        %v302 = vmul.f32 %v255, %v298
        %v303 = vmul.f32 %v258, %v299
        %v304 = vmul.f32 %v261, %v300
        %v305 = vmul.f32 %v264, %v301
        %v306 = vsub.f32 %v275, %v302
        %v307 = vsub.f32 %v278, %v303
        %v308 = vsub.f32 %v281, %v304
        %v309 = vsub.f32 %v284, %v305
        %v310 = vmul.f32 %v306, 0.00390625
        %v311 = vmul.f32 %v307, 0.00390625
        %v312 = vmul.f32 %v308, 0.00390625
        %v313 = vmul.f32 %v309, 0.00390625
        %v314 = vmax.f32 %v310, 0.0
        %v315 = vmax.f32 %v311, 0.0
        %v316 = vmax.f32 %v312, 0.0
        %v317 = vmax.f32 %v313, 0.0
        %v318 = vrsqrt.pop %v314
        %v319 = vmul.f32 %v318, %v314
        %v320 = vmul.f32 %v319, %v318
        %v321 = vmul.f32 0.5, %v320
        %v322 = vsub.f32 1.5, %v321
        %v323 = vmul.f32 %v318, %v322
        %v324 = vmul.f32 %v314, %v323
        %vm325 = vcmp.eq.f32.partialorder %v314, inf
        %v326 = vsel %vm325, %v314, %v324
        %vm327 = vcmp.eq.f32.partialorder %v314, 0.0
        %v328 = vand.u32 %v314, 2147483648
        %v329 = vsel %vm327, %v328, %v326
        %v330 = vrsqrt.pop %v315
        %v331 = vmul.f32 %v330, %v315
        %v332 = vmul.f32 %v331, %v330
        %v333 = vmul.f32 0.5, %v332
        %v334 = vsub.f32 1.5, %v333
        %v335 = vmul.f32 %v330, %v334
        %v336 = vmul.f32 %v315, %v335
        %vm337 = vcmp.eq.f32.partialorder %v315, inf
        %v338 = vsel %vm337, %v315, %v336
        %vm339 = vcmp.eq.f32.partialorder %v315, 0.0
        %v340 = vand.u32 %v315, 2147483648
        %v341 = vsel %vm339, %v340, %v338
        %v342 = vrsqrt.pop %v316
        %v343 = vmul.f32 %v342, %v316
        %v344 = vmul.f32 %v343, %v342
        %v345 = vmul.f32 0.5, %v344
        %v346 = vsub.f32 1.5, %v345
        %v347 = vmul.f32 %v342, %v346
        %v348 = vmul.f32 %v316, %v347
        %vm349 = vcmp.eq.f32.partialorder %v316, inf
        %v350 = vsel %vm349, %v316, %v348
        %vm351 = vcmp.eq.f32.partialorder %v316, 0.0
        %v352 = vand.u32 %v316, 2147483648
        %v353 = vsel %vm351, %v352, %v350
        %v354 = vrsqrt.pop %v317
        %v355 = vmul.f32 %v354, %v317
        %v356 = vmul.f32 %v355, %v354
        %v357 = vmul.f32 0.5, %v356
        %v358 = vsub.f32 1.5, %v357
        %v359 = vmul.f32 %v354, %v358
        %v360 = vmul.f32 %v317, %v359
        %vm361 = vcmp.eq.f32.partialorder %v317, inf
        %v362 = vsel %vm361, %v317, %v360
        %vm363 = vcmp.eq.f32.partialorder %v317, 0.0
        %v364 = vand.u32 %v317, 2147483648
        %v365 = vsel %vm363, %v364, %v362
        %v366 = vadd.f32 %v329, %v298
        %v367 = vadd.f32 %v341, %v299
        %v368 = vadd.f32 %v353, %v300
        %v369 = vadd.f32 %v365, %v301
        %v370 = vmul.f32 %v285, %v366
        %v371 = vmul.f32 %v286, %v367
        %v372 = vmul.f32 %v287, %v368
        %v373 = vmul.f32 %v288, %v369
        %vm374 = vcmask 15360
        %v375 = vsel %vm374, %v370, 0.0
        %v376 = vsel %vm374, %v371, 0.0
        %v377 = vadd.f32 %v375, %v376
        %v378 = vsel %vm374, %v372, 0.0
        %v379 = vadd.f32 %v377, %v378
        %v380 = vsel %vm374, %v373, 0.0
        %v381 = vadd.f32 %v379, %v380
        %v382 = vrot.slane %v381, 4
        %v383 = vadd.f32 %v381, %v382
        %v384 = vrot.slane %v383, 2
        %v385 = vadd.f32 %v383, %v384
        %v386 = vrot.slane %v385, 1
        %v387 = vadd.f32 %v385, %v386
        %v388 = vadd.f32 %v387, %v289
        %v389 = vmax.f32 %v388, 0.0
        %v390 = vperm.slane %v389, 0
        %v391 = vmul.f32 %v290, %v390
        %v392 = vmul.f32 %v291, %v390
        %v393 = vmul.f32 %v292, %v390
        %v394 = vmul.f32 %v293, %v390
        %v395 = vsel %vm374, %v391, 0.0
        %396 = vadd.xlane.f32.xlu0 %v395
        %v397 = vpop.xlane.xlu0 %396
        %v398 = vsel %vm374, %v392, 0.0
        %399 = vadd.xlane.f32.xlu0 %v398
        %v400 = vpop.xlane.xlu0 %399
        %v401 = vsel %vm374, %v393, 0.0
        %402 = vadd.xlane.f32.xlu0 %v401
        %v403 = vpop.xlane.xlu0 %402
        %v404 = vsel %vm374, %v394, 0.0
        %405 = vadd.xlane.f32.xlu0 %v404
        %v406 = vpop.xlane.xlu0 %405
        %v407 = vadd.f32 %v397, %v294
        %v408 = vadd.f32 %v400, %v295
        %v409 = vadd.f32 %v403, %v296
        %v410 = vadd.f32 %v406, %v297
        %v411 = vxor.u32 %v407, 2147483648
        %v412 = vxor.u32 %v408, 2147483648
        %v413 = vxor.u32 %v409, 2147483648
        %v414 = vxor.u32 %v410, 2147483648
        %v415 = vmul.f32 %v411, 1.442695
        %v416 = vpow.pop %v415
        %v417 = vmul.f32 %v412, 1.442695
        %v418 = vpow.pop %v417
        %v419 = vmul.f32 %v413, 1.442695
        %v420 = vpow.pop %v419
        %v421 = vmul.f32 %v414, 1.442695
        %v422 = vpow.pop %v421
        %v423 = vadd.f32 %v416, 1.0
        %v424 = vadd.f32 %v418, 1.0
        %v425 = vadd.f32 %v420, 1.0
        %v426 = vadd.f32 %v422, 1.0
        %v427 = vrcp.pop %v423
        %v428 = vmul.f32 %v423, %v427
        %v429 = vsub.f32 1.0, %v428
        %v430 = vmul.f32 %v427, %v429
        %v431 = vadd.f32 %v427, %v430
        %vm432 = vweird.f32 %v423
        %vm433 = vweird.f32 %v427
        %vm434 = vmor %vm432, %vm433
        %v435 = vsel %vm434, %v427, %v431
        %v436 = vand.u32 2147483647, %v423
        %vm437 = vcmp.eq.f32.partialorder %v436, 8.507059e+37
        %v438 = vand.u32 %v423, 2147483648
        %v439 = vor.u32 1.1754944e-38, %v438
        %v440 = vsel %vm437, %v439, %v435
        %v441 = vmul.f32 1.0, %v440
        %v442 = vrcp.pop %v424
        %v443 = vmul.f32 %v424, %v442
        %v444 = vsub.f32 1.0, %v443
        %v445 = vmul.f32 %v442, %v444
        %v446 = vadd.f32 %v442, %v445
        %vm447 = vweird.f32 %v424
        %vm448 = vweird.f32 %v442
        %vm449 = vmor %vm447, %vm448
        %v450 = vsel %vm449, %v442, %v446
        %v451 = vand.u32 2147483647, %v424
        %vm452 = vcmp.eq.f32.partialorder %v451, 8.507059e+37
        %v453 = vand.u32 %v424, 2147483648
        %v454 = vor.u32 1.1754944e-38, %v453
        %v455 = vsel %vm452, %v454, %v450
        %v456 = vmul.f32 1.0, %v455
        %v457 = vrcp.pop %v425
        %v458 = vmul.f32 %v425, %v457
        %v459 = vsub.f32 1.0, %v458
        %v460 = vmul.f32 %v457, %v459
        %v461 = vadd.f32 %v457, %v460
        %vm462 = vweird.f32 %v425
        %vm463 = vweird.f32 %v457
        %vm464 = vmor %vm462, %vm463
        %v465 = vsel %vm464, %v457, %v461
        %v466 = vand.u32 2147483647, %v425
        %vm467 = vcmp.eq.f32.partialorder %v466, 8.507059e+37
        %v468 = vand.u32 %v425, 2147483648
        %v469 = vor.u32 1.1754944e-38, %v468
        %v470 = vsel %vm467, %v469, %v465
        %v471 = vmul.f32 1.0, %v470
        %v472 = vrcp.pop %v426
        %v473 = vmul.f32 %v426, %v472
        %v474 = vsub.f32 1.0, %v473
        %v475 = vmul.f32 %v472, %v474
        %v476 = vadd.f32 %v472, %v475
        %vm477 = vweird.f32 %v426
        %vm478 = vweird.f32 %v472
        %vm479 = vmor %vm477, %vm478
        %v480 = vsel %vm479, %v472, %v476
        %v481 = vand.u32 2147483647, %v426
        %vm482 = vcmp.eq.f32.partialorder %v481, 8.507059e+37
        %v483 = vand.u32 %v426, 2147483648
        %v484 = vor.u32 1.1754944e-38, %v483
        %v485 = vsel %vm482, %v484, %v480
        %v486 = vmul.f32 1.0, %v485
        %488 = vset.pattern.permute.xlu0 0
        %489 = vperm.xlu0 %488, %v441
        %v490 = vpop.permute.xlu0 %489
        %493 = vset.pattern.permute.xlu0 0
        %494 = vperm.xlu0 %493, %v456
        %v495 = vpop.permute.xlu0 %494
        %498 = vset.pattern.permute.xlu0 0
        %499 = vperm.xlu0 %498, %v471
        %v500 = vpop.permute.xlu0 %499
        %503 = vset.pattern.permute.xlu0 0
        %504 = vperm.xlu0 %503, %v486
        %v505 = vpop.permute.xlu0 %504
        %v507 = vmul.f32 %v245, %v490
        %v508 = vmul.f32 %v246, %v490
        %v509 = vmul.f32 %v247, %v495
        %v510 = vmul.f32 %v248, %v495
        %v511 = vmul.f32 %v249, %v500
        %v512 = vmul.f32 %v250, %v500
        %v513 = vmul.f32 %v251, %v505
        %v514 = vmul.f32 %v252, %v505
        %515 = vst [vmem:[%s244] sm:$0xff] %v507
        %516 = vst [vmem:[%s244 + $0x8] sm:$0xff] %v508
        %517 = vst [vmem:[%s244 + $0x10] sm:$0xff] %v509
        %518 = vst [vmem:[%s244 + $0x18] sm:$0xff] %v510
        %519 = vst [vmem:[%s244 + $0x20] sm:$0xff] %v511
        %520 = vst [vmem:[%s244 + $0x28] sm:$0xff] %v512
        %521 = vst [vmem:[%s244 + $0x30] sm:$0xff] %v513
        %522 = vst [vmem:[%s244 + $0x38] sm:$0xff] %v514
        %s523 = sand.u32 %s140, 1
        %s524 = scalar_lea.sflag [#allocation4], %s523
        %s525 = sand.u32 %s140, 1
        %s526 = smul.addr %s525, 64
        %s527 = scalar_lea.vmem [#allocation5], %s526
        // Predicated region
        $region45: #{tpu_custom_call.1} parent=39 // pred_check
          %p528 = pneg %p150
        $region46: #{tpu_custom_call.1} parent=39 // pred_check_branch
          %530 = sbr.rel (%p528) target = $region48
        $region47: #{tpu_custom_call.1} parent=39 // pred_region
          %532 = vsyncadd %s524, 0
          %s533 = smul.addr %s22, 8
          %s534 = smul.addr %s533, 8
          %s535 = scalar_lea.hbm %s5, %s534
          %s536 = sshll.u32 %s527, 4
          %s537 = int_to_ptr.vmem [resolvable:$true] %s536
          %s538 = sshll.u32 %s535, 4
          %s539 = int_to_ptr.hbm [resolvable:$true] %s538
          %544 = dma.vmem_to_hbm [thread:$0]  %s537, 1024, %s539, %s524, 256, 256, 16
        $region48: #{tpu_custom_call.1} parent=39 // pred_fallthru
          _
      $region40: #{tpu_custom_call.1} parent=5 // pred_fallthru
        _
      %p545 = scmp.le.s32.totalorder 2, %s17
      // Predicated region
      $region49: #{tpu_custom_call.1} parent=5 // pred_check
        %p546 = pneg %p545
      $region50: #{tpu_custom_call.1} parent=5 // pred_check_branch
        %548 = sbr.rel (%p546) target = $region52
      $region51: #{tpu_custom_call.1} parent=5 // pred_region
        %s549 = ssub.s32 %s17, 2
        // Predicated region
        $region53: #{tpu_custom_call.1} parent=51 // pred_check
          %p550 = pneg %p156
        $region54: #{tpu_custom_call.1} parent=51 // pred_check_branch
          %552 = sbr.rel (%p550) target = $region56
        $region55: #{tpu_custom_call.1} parent=51 // pred_region
          %s553 = sand.u32 %s141, 1
          %s554 = scalar_lea.sflag [#allocation4], %s553
          %s555 = sand.u32 %s141, 1
          %s556 = smul.addr %s555, 64
          %s557 = scalar_lea.vmem [#allocation5], %s556
          %559 = dma.done %s554, 1024
        $region56: #{tpu_custom_call.1} parent=51 // pred_fallthru
          _
      $region52: #{tpu_custom_call.1} parent=5 // pred_fallthru
        _
    $region6: #{tpu_custom_call.1} parent=1 // loop_footer
      %s21 = sadd.s32 1, %s17
    $region7: #{tpu_custom_call.1} parent=1 // loop_footer_branch
      %16 = sbr.rel target = $region3
    $region8: #{tpu_custom_call.1} parent=1 // loop_exit
      _
    %560 = vsyncpa [#allocation3], 1
    %s561 = scalar_lea.sflag [#allocation3], 1
    %562 = vsyncpa %s561, 1
    %563 = vsyncpa [#allocation4], 1
    %s564 = scalar_lea.sflag [#allocation4], 1
    %565 = vsyncpa %s564, 1

</llo_original>
